<compile_context>
chip_gen: v5e
topology: v5e:2x2
jax: 0.10.0
libtpu: 0.0.40
codegen_flags: <defaults>
</compile_context>

<pallas_src>
import jax
import jax.numpy as jnp
import numpy as np
from jax.experimental import pallas as pl
from jax.experimental.pallas import tpu as pltpu

# ----------------------------- config ("args") ------------------------------
BS = 2
POD_NUM = 8            # number of graph nodes (pods)
SEQ_LEN = 8
EMBED_DIM = 4
HIDDEN_DIM = 32
MODAL_NUM = 3
EVENT_NUM = 16
EVENT_LEN = 10.0       # args.event_len (max_event_len)
USE_EVENT_NUMBER = 1

D_IN = MODAL_NUM * SEQ_LEN * (EMBED_DIM + USE_EVENT_NUMBER)   # 120
D_FUSION = 3 * HIDDEN_DIM                                     # 96
GAT_OUT = 1                                                   # gat1 out_features
LEAKY_ALPHA = 0.2

K_PAD = 128            # lane-padded (and MXU-K-padded) input width
W_PAD = 128            # lane-padded width of the packed weight slab / output
BIAS_ROW = D_IN        # row 120 of the weight slab = bias (ones column of x)
COL_H = D_FUSION       # column carrying h  = fusion @ w_gat
COL_F1 = D_FUSION + 1  # column carrying a[0] * h
COL_A1 = D_FUSION + 2  # constant column carrying the scalar a[1]


# ------------------------------ Pallas kernel -------------------------------
def gat_forward_kernel(x_ref, mask_ref, w_ref, out_ref):
    # x_ref: (R, 128) flattened (batch*node) features, col 120 == 1.0 (bias).
    x = x_ref[...]

    # One MXU matmul produces, per row:
    #   [ fusion (cols 0:96) | h (col 96) | a0*h (col 97) | a1 (col 98) | 0 ]
    # (bias is folded in via the ones column of x and row 120 of w).
    y = jnp.dot(x, w_ref[...], preferred_element_type=jnp.float32)

    h = y[:, COL_H:COL_H + 1]            # (R, 1)  gat1 projection
    f1 = y[:, COL_F1:COL_F1 + 1]         # (R, 1)  a[0] * h
    a1 = y[:, COL_A1:COL_A1 + 1]         # (R, 1)  constant column == a[1]

    # Column-broadcast of h via a rank-1 outer product (ones ⊗ h); avoids an
    # explicit sublane->lane transpose.  Reused for e AND for h'.
    ones_col = jnp.ones((x.shape[0], 1), jnp.float32)
    h_cols = jax.lax.dot_general(
        ones_col, h,
        dimension_numbers=(((1,), (1,)), ((), ())),
        preferred_element_type=jnp.float32)                       # (R, R): h[j]

    # e[i, j] = leaky_relu(a0*h[i] + a1*h[j])
    e = f1 + a1 * h_cols
    e = jnp.where(e > 0, e, LEAKY_ALPHA * e)                      # LeakyReLU(0.2)

    # Additive block-diagonal mask (0 where adj>0, -1e12 elsewhere).  Relies on
    # adj having self-loops so no row is fully masked.
    e = e + mask_ref[...]

    # softmax over last dim (dropout p=0 is identity)
    m = jnp.max(e, axis=-1, keepdims=True)
    p = jnp.exp(e - m)
    att = p * pl.reciprocal(jnp.sum(p, axis=-1, keepdims=True), approx=False)

    # h' = att @ h, computed as a VPU multiply + lane reduce (no 2nd MXU dot).
    h_prime = jnp.sum(att * h_cols, axis=-1, keepdims=True)        # (R, 1)
    hp = jnp.maximum(h_prime, 0.0)                                 # concat=True -> relu

    # Single lane-dense store: col COL_H carries relu(h'), cols 0:96 carry fusion.
    lane = jax.lax.broadcasted_iota(jnp.int32, y.shape, 1)
    out_ref[...] = jnp.where(lane == COL_H, hp, y)


def _gat_pallas_call(x_pad, adj_mask, w_cat):
    rows = x_pad.shape[0]
    return pl.pallas_call(
        gat_forward_kernel,
        out_shape=jax.ShapeDtypeStruct((rows, W_PAD), jnp.float32),
        grid_spec=pltpu.PrefetchScalarGridSpec(
            num_scalar_prefetch=0,
            grid=(1,),                                             # single step
            in_specs=[
                pl.BlockSpec((rows, K_PAD), lambda i: (0, 0)),     # padded features
                pl.BlockSpec((rows, rows), lambda i: (0, 0)),      # additive adj mask
                pl.BlockSpec((K_PAD, W_PAD), lambda i: (0, 0)),    # packed weights
            ],
            out_specs=pl.BlockSpec((rows, W_PAD), lambda i: (0, 0)),
        ),
        compiler_params=pltpu.CompilerParams(
            dimension_semantics=("arbitrary",)),
    )(x_pad, adj_mask, w_cat)


# ----------------------- one-time packing (cached) ---------------------------
def pack_gat_weights(w_enc, b_enc, w_gat, a_gat):
    """Pack shared_encoder + gat1 parameters into one (128, 128) weight slab.

    Called ONCE per parameter set (hoisted out of the forward path).
      cols [0:96] = w_enc            row 120 = b_enc
      col  96     = w_enc @ w_gat    row 120 = b_enc @ w_gat
      col  97     = a[0] * (w_enc @ w_gat), row 120 = a[0]*(b_enc @ w_gat)
      col  98     = 0 in weight rows,       row 120 = a[1]   (constant column)
    """
    hi = jax.lax.Precision.HIGHEST
    w_fused = jnp.matmul(w_enc, w_gat, precision=hi)               # (D_IN, 1)
    b_fused = jnp.matmul(b_enc, w_gat, precision=hi)               # (1, 1)
    a0 = a_gat[0, 0]
    a1 = a_gat[1, 0]

    w_cat = jnp.zeros((K_PAD, W_PAD), jnp.float32)
    w_cat = w_cat.at[:D_IN, :D_FUSION].set(w_enc)
    w_cat = w_cat.at[:D_IN, COL_H].set(w_fused[:, 0])
    w_cat = w_cat.at[:D_IN, COL_F1].set(a0 * w_fused[:, 0])
    # bias row (activated by the ones column appended to the features)
    w_cat = w_cat.at[BIAS_ROW, :D_FUSION].set(b_enc[0])
    w_cat = w_cat.at[BIAS_ROW, COL_H].set(b_fused[0, 0])
    w_cat = w_cat.at[BIAS_ROW, COL_F1].set(a0 * b_fused[0, 0])
    w_cat = w_cat.at[BIAS_ROW, COL_A1].set(a1)
    return w_cat


def pack_adj_mask(adj, bs):
    """Block-diagonal additive attention mask for the flattened batch.

    Called ONCE per adjacency (hoisted out of the forward path).
    """
    adj_block = jnp.kron(jnp.eye(bs, dtype=adj.dtype), adj)        # (bs*pn, bs*pn)
    return jnp.where(adj_block > 0, 0.0, -1.0e12).astype(jnp.float32)


# ----------------------------- jitted forward --------------------------------
def _gat_module_forward(embedding, w_cat, adj_mask, l_e, m_e, t_e, l_c, m_c, t_c):
    # Embedding gather / normalize counts / concat glue, fused by XLA under jit.
    # TODO(synk): the (16, 4) embedding gather + concat could be absorbed into
    # the Pallas kernel (one-hot matmul / SMEM indices); kept in XLA glue here.
    def encode(e_idx, c):
        r = embedding[e_idx]                             # (bs, pn, seq, embed_dim)
        c = (c / EVENT_LEN)[..., None]                   # (bs, pn, seq, 1)
        return jnp.concatenate([r, c], axis=-1)          # (bs, pn, seq, embed_dim+1)

    fusion_in = jnp.concatenate(
        [encode(l_e, l_c), encode(m_e, m_c), encode(t_e, t_c)], axis=-1)
    bs, pn = l_e.shape[:2]
    rows = bs * pn
    x2d = fusion_in.reshape(rows, D_IN).astype(jnp.float32)

    # K-pad to 128: ones column at row BIAS_ROW activates the bias row of w_cat.
    pad = jnp.zeros((rows, K_PAD - D_IN), jnp.float32).at[:, 0].set(1.0)
    x_pad = jnp.concatenate([x2d, pad], axis=-1)                   # (rows, 128)

    out = _gat_pallas_call(x_pad, adj_mask, w_cat)

    fusion_r = out[:, :D_FUSION].reshape(bs, pn, D_FUSION)
    x_out = out[:, COL_H:COL_H + 1].reshape(bs, pn, GAT_OUT)
    return x_out, fusion_r


gat_module_forward = jax.jit(_gat_module_forward)


# ----------------------------- pure-JAX reference ----------------------------
def gat_module_reference(params, l_e, m_e, t_e, l_c, m_c, t_c, adj):
    """Pure-JAX reference mirroring the torch forward (only_use_gat path)."""
    emb = params["embedding"]

    def encode(e_idx, c):
        r = emb[e_idx]
        return jnp.concatenate([r, (c / EVENT_LEN)[..., None]], axis=-1)

    fusion_in = jnp.concatenate(
        [encode(l_e, l_c), encode(m_e, m_c), encode(t_e, t_c)], axis=-1)
    bs, pn = l_e.shape[:2]
    fusion_in = fusion_in.reshape(bs, pn, -1).astype(jnp.float32)

    fusion = fusion_in @ params["w_enc"] + params["b_enc"]          # (bs, pn, 96)
    h = fusion @ params["w_gat"]                                    # (bs, pn, 1)
    a = params["a_gat"]
    f1 = h @ a[:GAT_OUT]                                            # (bs, pn, 1)
    f2 = h @ a[GAT_OUT:]                                            # (bs, pn, 1)
    e = f1 + jnp.swapaxes(f2, -1, -2)                               # (bs, pn, pn)
    e = jnp.where(e > 0, e, LEAKY_ALPHA * e)
    e = jnp.where(adj[None] > 0, e, -1.0e12)
    att = jax.nn.softmax(e, axis=-1)
    h_prime = att @ h
    return jnp.maximum(h_prime, 0.0), fusion


# --------------------------------- main --------------------------------------
if __name__ == "__main__":
    key = jax.random.PRNGKey(0)
    ks = jax.random.split(key, 12)

    def xavier(k, shape, gain=1.414):
        fan_in, fan_out = shape[0], shape[-1]
        limit = gain * np.sqrt(6.0 / (fan_in + fan_out))
        return jax.random.uniform(k, shape, jnp.float32, -limit, limit)

    params = {
        "embedding": jax.random.normal(ks[0], (EVENT_NUM, EMBED_DIM), jnp.float32),
        "w_enc": xavier(ks[1], (D_IN, D_FUSION), gain=1.0),
        "b_enc": 0.01 * jax.random.normal(ks[2], (1, D_FUSION), jnp.float32),
        "w_gat": xavier(ks[3], (D_FUSION, GAT_OUT)),
        "a_gat": xavier(ks[4], (2 * GAT_OUT, 1)),
    }
    # TODO(synk): pagerank / decoder / gat2 / non-shared-encoder branches are
    # not exercised by this config (use_shared_encoder + only_use_gat path).

    l_e = jax.random.randint(ks[5], (BS, POD_NUM, SEQ_LEN), 0, EVENT_NUM)
    m_e = jax.random.randint(ks[6], (BS, POD_NUM, SEQ_LEN), 0, EVENT_NUM)
    t_e = jax.random.randint(ks[7], (BS, POD_NUM, SEQ_LEN), 0, EVENT_NUM)
    l_c = jax.random.uniform(ks[8], (BS, POD_NUM, SEQ_LEN), jnp.float32, 0.0, EVENT_LEN)
    m_c = jax.random.uniform(ks[9], (BS, POD_NUM, SEQ_LEN), jnp.float32, 0.0, EVENT_LEN)
    t_c = jax.random.uniform(ks[10], (BS, POD_NUM, SEQ_LEN), jnp.float32, 0.0, EVENT_LEN)

    adj = (jax.random.uniform(ks[11], (POD_NUM, POD_NUM)) > 0.5).astype(jnp.float32)
    adj = jnp.maximum(adj, jnp.eye(POD_NUM, dtype=jnp.float32))   # self-loops

    # One-time packing (cached per parameter set / adjacency; NOT in the
    # per-forward path).
    w_cat = pack_gat_weights(params["w_enc"], params["b_enc"],
                             params["w_gat"], params["a_gat"])
    adj_mask = pack_adj_mask(adj, BS)
    jax.block_until_ready((w_cat, adj_mask))

    x, fusion_r = gat_module_forward(params["embedding"], w_cat, adj_mask,
                                     l_e, m_e, t_e, l_c, m_c, t_c)
    jax.block_until_ready((x, fusion_r))

    x_ref, fusion_ref = gat_module_reference(params, l_e, m_e, t_e, l_c, m_c, t_c, adj)
    np.testing.assert_allclose(np.asarray(fusion_r), np.asarray(fusion_ref),
                               rtol=1e-5, atol=1e-4)
    np.testing.assert_allclose(np.asarray(x), np.asarray(x_ref),
                               rtol=1e-5, atol=1e-4)

    print("KERNEL_OK")
</pallas_src>

<mosaic_0001>
module attributes {stable_mosaic.version = 11 : i64} {
  func.func @gat_forward_kernel(%arg0: i32, %arg1: memref<16x128xf32, #tpu.memory_space<vmem>>, %arg2: memref<16x16xf32, #tpu.memory_space<vmem>>, %arg3: memref<128x128xf32, #tpu.memory_space<vmem>>, %arg4: memref<16x128xf32, #tpu.memory_space<vmem>>) attributes {dimension_semantics = [#tpu.dimension_semantics<arbitrary>], iteration_bounds = array<i64: 1>, scalar_prefetch = 0 : i64, scratch_operands = 0 : i64, tpu.core_type = #tpu.core_type<tc>, window_params = [{pipeline_mode = #tpu.pipeline_mode<synchronous>, transform_indices = @transform_0, window_bounds = array<i64: 16, 128>}, {pipeline_mode = #tpu.pipeline_mode<synchronous>, transform_indices = @transform_1, window_bounds = array<i64: 16, 16>}, {pipeline_mode = #tpu.pipeline_mode<synchronous>, transform_indices = @transform_2, window_bounds = array<i64: 128, 128>}, {pipeline_mode = #tpu.pipeline_mode<synchronous>, transform_indices = @transform_3, window_bounds = array<i64: 16, 128>}]} {
    %c0 = arith.constant 0 : index
    %c0_0 = arith.constant 0 : index
    %0 = vector.load %arg1[%c0, %c0_0] : memref<16x128xf32, #tpu.memory_space<vmem>>, vector<16x128xf32>
    %c0_1 = arith.constant 0 : index
    %c0_2 = arith.constant 0 : index
    %1 = vector.load %arg3[%c0_1, %c0_2] : memref<128x128xf32, #tpu.memory_space<vmem>>, vector<128x128xf32>
    %cst = arith.constant dense<0.000000e+00> : vector<16x128xf32>
    %2 = tpu.matmul %0, %1, %cst {dimension_numbers = #tpu.dot_dimension_numbers<[1], [0], [0], [1], [0, 0, 1, 1], [], []>} : vector<16x128xf32>, vector<128x128xf32>, vector<16x128xf32> -> vector<16x128xf32>
    %3 = vector.extract_strided_slice %2 {offsets = [0, 96], sizes = [16, 1], strides = [1, 1]} : vector<16x128xf32> to vector<16x1xf32>
    %4 = vector.extract_strided_slice %2 {offsets = [0, 97], sizes = [16, 1], strides = [1, 1]} : vector<16x128xf32> to vector<16x1xf32>
    %5 = vector.extract_strided_slice %2 {offsets = [0, 98], sizes = [16, 1], strides = [1, 1]} : vector<16x128xf32> to vector<16x1xf32>
    %cst_3 = arith.constant 1.000000e+00 : f32
    %6 = vector.broadcast %cst_3 : f32 to vector<16x1xf32>
    %cst_4 = arith.constant dense<0.000000e+00> : vector<16x16xf32>
    %7 = tpu.matmul %6, %3, %cst_4 {dimension_numbers = #tpu.dot_dimension_numbers<[1], [1], [0], [0], [0, 0, 1, 0], [], []>} : vector<16x1xf32>, vector<16x1xf32>, vector<16x16xf32> -> vector<16x16xf32>
    %8 = vector.broadcast %5 : vector<16x1xf32> to vector<16x16xf32>
    %9 = arith.mulf %8, %7 : vector<16x16xf32>
    %10 = vector.broadcast %4 : vector<16x1xf32> to vector<16x16xf32>
    %11 = arith.addf %10, %9 : vector<16x16xf32>
    %cst_5 = arith.constant 0.000000e+00 : f32
    %12 = vector.broadcast %cst_5 : f32 to vector<16x16xf32>
    %13 = arith.cmpf ogt, %11, %12 : vector<16x16xf32>
    %cst_6 = arith.constant 2.000000e-01 : f32
    %14 = vector.broadcast %cst_6 : f32 to vector<16x16xf32>
    %15 = arith.mulf %14, %11 : vector<16x16xf32>
    %16 = arith.select %13, %11, %15 : vector<16x16xi1>, vector<16x16xf32>
    %c0_7 = arith.constant 0 : index
    %c0_8 = arith.constant 0 : index
    %17 = vector.load %arg2[%c0_7, %c0_8] : memref<16x16xf32, #tpu.memory_space<vmem>>, vector<16x16xf32>
    %18 = arith.addf %16, %17 : vector<16x16xf32>
    %cst_9 = arith.constant dense<0xFF800000> : vector<16xf32>
    %19 = vector.multi_reduction <maximumf>, %18, %cst_9 [1] : vector<16x16xf32> to vector<16xf32>
    %20 = vector.shape_cast %19 : vector<16xf32> to vector<16x1xf32>
    %21 = vector.broadcast %20 : vector<16x1xf32> to vector<16x16xf32>
    %22 = arith.subf %18, %21 : vector<16x16xf32>
    %23 = math.exp %22 : vector<16x16xf32>
    %cst_10 = arith.constant dense<0.000000e+00> : vector<16xf32>
    %24 = vector.multi_reduction <add>, %23, %cst_10 [1] : vector<16x16xf32> to vector<16xf32>
    %25 = vector.shape_cast %24 : vector<16xf32> to vector<16x1xf32>
    %26 = tpu.reciprocal %25 : vector<16x1xf32> -> vector<16x1xf32>
    %27 = vector.broadcast %26 : vector<16x1xf32> to vector<16x16xf32>
    %28 = arith.mulf %23, %27 : vector<16x16xf32>
    %29 = arith.mulf %28, %7 : vector<16x16xf32>
    %cst_11 = arith.constant dense<0.000000e+00> : vector<16xf32>
    %30 = vector.multi_reduction <add>, %29, %cst_11 [1] : vector<16x16xf32> to vector<16xf32>
    %31 = vector.shape_cast %30 : vector<16xf32> to vector<16x1xf32>
    %cst_12 = arith.constant 0.000000e+00 : f32
    %32 = vector.broadcast %cst_12 : f32 to vector<16x1xf32>
    %33 = arith.maximumf %31, %32 : vector<16x1xf32>
    %34 = tpu.iota {dimensions = array<i32: 1>} : vector<16x128xi32>
    %c96_i32 = arith.constant 96 : i32
    %35 = vector.broadcast %c96_i32 : i32 to vector<16x128xi32>
    %36 = arith.cmpi eq, %34, %35 : vector<16x128xi32>
    %37 = vector.shape_cast %33 : vector<16x1xf32> to vector<16x1xf32>
    %38 = vector.broadcast %37 : vector<16x1xf32> to vector<16x128xf32>
    %39 = arith.select %36, %38, %2 : vector<16x128xi1>, vector<16x128xf32>
    %c0_13 = arith.constant 0 : index
    %c0_14 = arith.constant 0 : index
    %40 = vector.load %arg4[%c0_13, %c0_14] : memref<16x128xf32, #tpu.memory_space<vmem>>, vector<16x128xf32>
    tpu.vector_store %arg4[%c0_13, %c0_14], %39 {strides = array<i32>} : memref<16x128xf32, #tpu.memory_space<vmem>>, vector<16x128xf32>,
    return
  }
  func.func @transform_0(%arg0: i32) -> (i32, i32) {
    %c0_i32 = arith.constant 0 : i32
    %c0_i32_0 = arith.constant 0 : i32
    %c0_i32_1 = arith.constant 0 : i32
    return %c0_i32, %c0_i32_0 : i32, i32
  }
  func.func @transform_1(%arg0: i32) -> (i32, i32) {
    %c0_i32 = arith.constant 0 : i32
    %c0_i32_0 = arith.constant 0 : i32
    %c0_i32_1 = arith.constant 0 : i32
    return %c0_i32, %c0_i32_0 : i32, i32
  }
  func.func @transform_2(%arg0: i32) -> (i32, i32) {
    %c0_i32 = arith.constant 0 : i32
    %c0_i32_0 = arith.constant 0 : i32
    %c0_i32_1 = arith.constant 0 : i32
    return %c0_i32, %c0_i32_0 : i32, i32
  }
  func.func @transform_3(%arg0: i32) -> (i32, i32) {
    %c0_i32 = arith.constant 0 : i32
    %c0_i32_0 = arith.constant 0 : i32
    %c0_i32_1 = arith.constant 0 : i32
    return %c0_i32, %c0_i32_0 : i32, i32
  }
}

</mosaic_0001>

<llo_original>
// kernel: _gat_module_forward.1
$region0: #{_gat_module_forward.1}
  #allocation0 [shape = 'u32[]', space=smem, size = 0x4, offset = 0x4, fixed_abs, tag = 'smem constant byte address 0x4 - core index']
  #allocation1 [shape = 'u32[72,128]{1,0:T(1,128)}', space=vmem, size = 0x9000, scoped, tag = 'internal scratch']
  %s0 = inlined_call_operand.vmem [shape: f32[16,128], index: 0, kind: input, shape index: {}]
  %s1 = inlined_call_operand.vmem [shape: f32[16,16], index: 1, kind: input, shape index: {}]
  %s2 = inlined_call_operand.vmem [shape: f32[128,128], index: 2, kind: input, shape index: {}]
  %s3 = inlined_call_operand.vmem [shape: f32[16,128], index: 3, kind: output, shape index: {}]
  %s4 = sld [smem:[#allocation0]]
  $region22: #{_gat_module_forward.1} parent=0
    _
  %s6 = ssub.s32 1, %s4
  %s7 = scalar_select 0, %s6, %s4
  // Predicated region
  $region2: #{_gat_module_forward.1} parent=0 // pred_check
    _
  $region3: #{_gat_module_forward.1} parent=0 // pred_check_branch
    %9 = sbr.rel (0) target = $region5
  $region4: #{_gat_module_forward.1} parent=0 // pred_region
    _
  $region5: #{_gat_module_forward.1} parent=0 // pred_fallthru
    _
  // Predicated region
  $region6: #{_gat_module_forward.1} parent=0 // pred_check
    _
  $region7: #{_gat_module_forward.1} parent=0 // pred_check_branch
    %11 = sbr.rel (0) target = $region9
  $region8: #{_gat_module_forward.1} parent=0 // pred_region
    _
  $region9: #{_gat_module_forward.1} parent=0 // pred_fallthru
    _
  // Predicated region
  $region10: #{_gat_module_forward.1} parent=0 // pred_check
    _
  $region11: #{_gat_module_forward.1} parent=0 // pred_check_branch
    %13 = sbr.rel (0) target = $region13
  $region12: #{_gat_module_forward.1} parent=0 // pred_region
    _
  $region13: #{_gat_module_forward.1} parent=0 // pred_fallthru
    _
  %v14 = vld [vmem:[%s0] sm:$0xff]
  %v15 = vld [vmem:[%s0 + $0x8] sm:$0xff]
  %v16 = vld [vmem:[%s2] sm:$0xff]
  %v17 = vld [vmem:[%s2 + $0x8] sm:$0xff]
  %v18 = vld [vmem:[%s2 + $0x10] sm:$0xff]
  %v19 = vld [vmem:[%s2 + $0x18] sm:$0xff]
  %v20 = vld [vmem:[%s2 + $0x20] sm:$0xff]
  %v21 = vld [vmem:[%s2 + $0x28] sm:$0xff]
  %v22 = vld [vmem:[%s2 + $0x30] sm:$0xff]
  %v23 = vld [vmem:[%s2 + $0x38] sm:$0xff]
  %v24 = vld [vmem:[%s2 + $0x40] sm:$0xff]
  %v25 = vld [vmem:[%s2 + $0x48] sm:$0xff]
  %v26 = vld [vmem:[%s2 + $0x50] sm:$0xff]
  %v27 = vld [vmem:[%s2 + $0x58] sm:$0xff]
  %v28 = vld [vmem:[%s2 + $0x60] sm:$0xff]
  %v29 = vld [vmem:[%s2 + $0x68] sm:$0xff]
  %v30 = vld [vmem:[%s2 + $0x70] sm:$0xff]
  %v31 = vld [vmem:[%s2 + $0x78] sm:$0xff]
  %32 = vmatpush.msra.mxu0 %v31
  %33 = vmatpush.msra.mxu0 %v30
  %34 = vmatpush.msra.mxu0 %v29
  %35 = vmatpush.msra.mxu0 %v28
  %36 = vmatpush.msra.mxu0 %v27
  %37 = vmatpush.msra.mxu0 %v26
  %38 = vmatpush.msra.mxu0 %v25
  %39 = vmatpush.msra.mxu0 %v24
  %40 = vmatpush.msra.mxu0 %v23
  %41 = vmatpush.msra.mxu0 %v22
  %42 = vmatpush.msra.mxu0 %v21
  %43 = vmatpush.msra.mxu0 %v20
  %44 = vmatpush.msra.mxu0 %v19
  %45 = vmatpush.msra.mxu0 %v18
  %46 = vmatpush.msra.mxu0 %v17
  %47 = vmatpush.msra.mxu0 %v16
  %48 = vmatmul.f32.gmra.mxu0 %v14
  %v49 = vpop.f32.mrf.mxu0
  %v50 = vadd.f32 0.0, %v49
  %51 = vmatmul.f32.gmra.mxu0 %v15
  %v52 = vpop.f32.mrf.mxu0
  %v53 = vadd.f32 0.0, %v52
  %54 = vdwg.mxu0
  %57 = vrot.lane.b32.xlu0 %v50, 32
  %v58 = vpop.permute.xlu0 %57
  %59 = vrot.lane.b32.xlu0 %v53, 32
  %v60 = vpop.permute.xlu0 %59
  %vm61 = vcmask 7168
  %v63 = vsel %vm61, 1.0, 0
  %v65 = vsel %vm61, %v58, 0
  %v67 = vsel %vm61, %v60, 0
  %69 = vmatpush.xpose.msra.mxu0 0.0
  %70 = vmatpush.xpose.msra.mxu0 0.0
  %71 = vmatpush.xpose.msra.mxu0 0.0
  %72 = vmatpush.xpose.msra.mxu0 0.0
  %73 = vmatpush.xpose.msra.mxu0 0.0
  %74 = vmatpush.xpose.msra.mxu0 0.0
  %75 = vmatpush.xpose.msra.mxu0 0.0
  %76 = vmatpush.xpose.msra.mxu0 0.0
  %77 = vmatpush.xpose.msra.mxu0 0.0
  %78 = vmatpush.xpose.msra.mxu0 0.0
  %79 = vmatpush.xpose.msra.mxu0 0.0
  %80 = vmatpush.xpose.msra.mxu0 0.0
  %81 = vmatpush.xpose.msra.mxu0 0.0
  %82 = vmatpush.xpose.msra.mxu0 0.0
  %83 = vmatpush.xpose.msra.mxu0 %v67
  %84 = vmatpush.xpose.msra.mxu0 %v65
  %85 = vmatmul.f32.gmra.mxu0 %v63
  %v86 = vpop.f32.mrf.mxu0
  %v87 = vadd.f32 0.0, %v86
  %88 = vmatmul.f32.gmra.mxu0 %v63
  %v89 = vpop.f32.mrf.mxu0
  %v90 = vadd.f32 0.0, %v89
  %91 = vdwg.mxu0
  %92 = vset.pattern.permute.xlu0 98
  %93 = vperm.xlu0 %92, %v50
  %v94 = vpop.permute.xlu0 %93
  %96 = vset.pattern.permute.xlu0 98
  %97 = vperm.xlu0 %96, %v53
  %v98 = vpop.permute.xlu0 %97
  %v100 = vmul.f32 %v94, %v87
  %v101 = vmul.f32 %v98, %v90
  %102 = vset.pattern.permute.xlu0 97
  %103 = vperm.xlu0 %102, %v50
  %v104 = vpop.permute.xlu0 %103
  %106 = vset.pattern.permute.xlu0 97
  %107 = vperm.xlu0 %106, %v53
  %v108 = vpop.permute.xlu0 %107
  %v110 = vadd.f32 %v104, %v100
  %v111 = vadd.f32 %v108, %v101
  %vm112 = vcmp.gt.f32.partialorder %v110, 0.0
  %vm113 = vcmp.gt.f32.partialorder %v111, 0.0
  %v114 = vmul.f32 %v110, 0.2
  %v115 = vmul.f32 %v111, 0.2
  %v116 = vsel %vm112, %v110, %v114
  %v117 = vsel %vm113, %v111, %v115
  %v118 = vld [vmem:[%s1] sm:$0xff]
  %v119 = vld [vmem:[%s1 + $0x8] sm:$0xff]
  %v120 = vadd.f32 %v116, %v118
  %v121 = vadd.f32 %v117, %v119
  %vm122 = vcmask 130048
  %v123 = vsel %vm122, %v120, -inf
  %124 = vmax.xlane.f32.xlu0 %v123
  %v125 = vpop.xlane.xlu0 %124
  %v126 = vsel %vm122, %v121, -inf
  %127 = vmax.xlane.f32.xlu0 %v126
  %v128 = vpop.xlane.xlu0 %127
  %v129 = vsub.f32 %v120, %v125
  %v130 = vsub.f32 %v121, %v128
  %v131 = vmul.f32 %v129, 1.442695
  %v132 = vpow.pop %v131
  %v133 = vmul.f32 %v130, 1.442695
  %v134 = vpow.pop %v133
  %v135 = vsel %vm122, %v132, 0.0
  %136 = vadd.xlane.f32.xlu0 %v135
  %v137 = vpop.xlane.xlu0 %136
  %v138 = vsel %vm122, %v134, 0.0
  %139 = vadd.xlane.f32.xlu0 %v138
  %v140 = vpop.xlane.xlu0 %139
  %v141 = vrcp.pop %v137
  %v142 = vmul.f32 %v137, %v141
  %v143 = vsub.f32 1.0, %v142
  %v144 = vmul.f32 %v141, %v143
  %v145 = vadd.f32 %v141, %v144
  %vm146 = vweird.f32 %v137
  %vm147 = vweird.f32 %v141
  %vm148 = vmor %vm146, %vm147
  %v149 = vsel %vm148, %v141, %v145
  %v150 = vand.u32 2147483647, %v137
  %vm151 = vcmp.eq.f32.partialorder %v150, 8.507059e+37
  %v152 = vand.u32 %v137, 2147483648
  %v153 = vor.u32 1.1754944e-38, %v152
  %v154 = vsel %vm151, %v153, %v149
  %v155 = vrcp.pop %v140
  %v156 = vmul.f32 %v140, %v155
  %v157 = vsub.f32 1.0, %v156
  %v158 = vmul.f32 %v155, %v157
  %v159 = vadd.f32 %v155, %v158
  %vm160 = vweird.f32 %v140
  %vm161 = vweird.f32 %v155
  %vm162 = vmor %vm160, %vm161
  %v163 = vsel %vm162, %v155, %v159
  %v164 = vand.u32 2147483647, %v140
  %vm165 = vcmp.eq.f32.partialorder %v164, 8.507059e+37
  %v166 = vand.u32 %v140, 2147483648
  %v167 = vor.u32 1.1754944e-38, %v166
  %v168 = vsel %vm165, %v167, %v163
  %v169 = vmul.f32 %v132, %v154
  %v170 = vmul.f32 %v134, %v168
  %v171 = vmul.f32 %v169, %v87
  %v172 = vmul.f32 %v170, %v90
  %v173 = vsel %vm122, %v171, 0.0
  %174 = vadd.xlane.f32.xlu0 %v173
  %v175 = vpop.xlane.xlu0 %174
  %v176 = vsel %vm122, %v172, 0.0
  %177 = vadd.xlane.f32.xlu0 %v176
  %v178 = vpop.xlane.xlu0 %177
  %v179 = vmax.f32 %v175, 0.0
  %v180 = vmax.f32 %v178, 0.0
  %v181 = vlaneseq
  %v182 = vand.u32 %v181, 127
  %vm183 = vcmp.eq.s32.totalorder %v182, 96
  %v184 = vsel %vm183, %v179, %v50
  %v185 = vsel %vm183, %v180, %v53
  %186 = vst [vmem:[%s3] sm:$0xff] %v184
  %187 = vst [vmem:[%s3 + $0x8] sm:$0xff] %v185
  // Predicated region
  $region14: #{_gat_module_forward.1} parent=0 // pred_check
    _
  $region15: #{_gat_module_forward.1} parent=0 // pred_check_branch
    %189 = sbr.rel (0) target = $region17
  $region16: #{_gat_module_forward.1} parent=0 // pred_region
    _
  $region17: #{_gat_module_forward.1} parent=0 // pred_fallthru
    _
  // Predicated region
  $region18: #{_gat_module_forward.1} parent=0 // pred_check
    _
  $region19: #{_gat_module_forward.1} parent=0 // pred_check_branch
    %191 = sbr.rel (0) target = $region21
  $region20: #{_gat_module_forward.1} parent=0 // pred_region
    _
  $region21: #{_gat_module_forward.1} parent=0 // pred_fallthru
    _

</llo_original>
